<compile_context>
chip_gen: v5e
topology: v5e:2x2
jax: 0.10.0
libtpu: 0.0.40
codegen_flags: <defaults>
</compile_context>

<pallas_src>
import jax
import jax.numpy as jnp
from jax.experimental import pallas as pl
from jax.experimental.pallas import tpu as pltpu

_EPS = 1e-5

_STATS_TILE_BYTES = 8 << 20   # stats pass: only the input is a big buffer
_APPLY_TILE_BYTES = 4 << 20   # apply pass: big input AND big output
_VMEM_LIMIT_BYTES = 32 << 20  # explicit scoped-VMEM budget (ok on v5e..v7x)


def _stats_kernel(x_ref, stats_ref):
    """Per-row [sum, sum_sq] over the last axis, packed into lane dim 2."""
    # Note (v7x/bf16): keeping the f32 upcast is VALU-safe for f32 inputs; for
    # bf16 inputs on v7x one could square in bf16 and accumulate in f32 if the
    # VALU slot ever becomes the binding unit.
    x = x_ref[...].astype(jnp.float32)                    # (TILE_R, L)
    s = jnp.sum(x, axis=-1, keepdims=True)                # (TILE_R, 1)
    sq = jnp.sum(x * x, axis=-1, keepdims=True)           # (TILE_R, 1)
    stats_ref[...] = jnp.concatenate([s, sq], axis=-1)    # (TILE_R, 2)


def _apply_kernel(x_ref, ss_ref, o_ref):
    """y = x * scale + shift with packed per-row [scale, shift]."""
    x = x_ref[...].astype(jnp.float32)                    # (TILE_R, L)
    scale = ss_ref[:, 0:1]                                # (TILE_R, 1)
    shift = ss_ref[:, 1:2]                                # (TILE_R, 1)
    o_ref[...] = (x * scale + shift).astype(o_ref.dtype)


def _pick_tile_rows(R, L, itemsize, target_bytes):
    """Row-tile size for a (R, L) view.

    * aligned to the dtype's sublane packing (f32: 8, bf16: 16, int8: 32),
    * sized to ~target_bytes per big buffer,
    * capped so the grid keeps >=2 (ideally >=4) steps whenever R permits,
      so the "parallel" row axis can shard across TensorCores and the
      pipeline has something to overlap.
    """
    align = max(8, 32 // max(1, itemsize))
    r_full = ((R + align - 1) // align) * align
    rows = (target_bytes // max(1, L * itemsize)) // align * align
    rows = max(align, min(int(rows), r_full))
    for n_tiles in (4, 2):
        cap = (R // n_tiles) // align * align
        if cap >= align:
            rows = min(rows, cap)
            break
    return rows


def ibn_forward(x, in_gamma, in_beta, bn_gamma, bn_beta, eps=_EPS):
    """IBN forward. x: (N, C, H, W) -> (N, C, H, W)."""
    N, C, H, W = x.shape
    h1 = C // 2
    h2 = C - h1
    L = H * W
    R = N * C
    itemsize = jnp.dtype(x.dtype).itemsize

    # Free reshape (row-major NCHW): rows are (n, c) slices over H*W.
    x2d = x.reshape(R, L)

    # ---- pass 1: per-(n, c) [sum, sum_sq] packed into (R, 2) ---------------
    tile_r_s = _pick_tile_rows(R, L, itemsize, _STATS_TILE_BYTES)
    grid_s = (pl.cdiv(R, tile_r_s),)
    stats = pl.pallas_call(
        _stats_kernel,
        out_shape=jax.ShapeDtypeStruct((R, 2), jnp.float32),
        grid=grid_s,
        in_specs=[pl.BlockSpec((tile_r_s, L), lambda r: (r, 0))],
        out_specs=pl.BlockSpec((tile_r_s, 2), lambda r: (r, 0)),
        compiler_params=pltpu.CompilerParams(
            dimension_semantics=("parallel",),
            vmem_limit_bytes=_VMEM_LIMIT_BYTES),
        cost_estimate=pl.CostEstimate(
            flops=3 * R * L, transcendentals=0,
            bytes_accessed=R * L * itemsize + R * 2 * 4),
    )(x2d)

    sums = stats[:, 0].reshape(N, C)
    sqs = stats[:, 1].reshape(N, C)

    # ---- tiny JAX combine: stats -> packed per-row [scale, shift] ----------
    # InstanceNorm2d(affine=True): stats per (n, c) over H*W (biased var).
    cnt_in = jnp.float32(L)
    mean_in = sums[:, :h1] / cnt_in
    var_in = jnp.maximum(sqs[:, :h1] / cnt_in - mean_in * mean_in, 0.0)
    scale_in = in_gamma[None, :] * jax.lax.rsqrt(var_in + eps)      # (N, h1)
    shift_in = in_beta[None, :] - mean_in * scale_in

    # BatchNorm2d (training-mode batch stats): per channel over N*H*W.
    cnt_bn = jnp.float32(N * L)
    mean_bn = jnp.sum(sums[:, h1:], axis=0) / cnt_bn
    var_bn = jnp.maximum(jnp.sum(sqs[:, h1:], axis=0) / cnt_bn
                         - mean_bn * mean_bn, 0.0)
    scale_bn_c = bn_gamma * jax.lax.rsqrt(var_bn + eps)             # (h2,)
    shift_bn_c = bn_beta - mean_bn * scale_bn_c
    scale_bn = jnp.broadcast_to(scale_bn_c[None, :], (N, h2))
    shift_bn = jnp.broadcast_to(shift_bn_c[None, :], (N, h2))

    scale = jnp.concatenate([scale_in, scale_bn], axis=1).reshape(R)
    shift = jnp.concatenate([shift_in, shift_bn], axis=1).reshape(R)
    scale_shift = jnp.stack([scale, shift], axis=-1)                # (R, 2)

    # TODO(synk): BatchNorm2d running_mean / running_var updates (training-time
    # bookkeeping on the module) are not reproduced here.

    # ---- pass 2: fused scale/shift apply over the whole tensor -------------
    tile_r_a = _pick_tile_rows(R, L, itemsize, _APPLY_TILE_BYTES)
    grid_a = (pl.cdiv(R, tile_r_a),)
    y2d = pl.pallas_call(
        _apply_kernel,
        out_shape=jax.ShapeDtypeStruct((R, L), x.dtype),
        grid=grid_a,
        in_specs=[pl.BlockSpec((tile_r_a, L), lambda r: (r, 0)),
                  pl.BlockSpec((tile_r_a, 2), lambda r: (r, 0))],
        out_specs=pl.BlockSpec((tile_r_a, L), lambda r: (r, 0)),
        compiler_params=pltpu.CompilerParams(
            dimension_semantics=("parallel",),
            vmem_limit_bytes=_VMEM_LIMIT_BYTES),
        cost_estimate=pl.CostEstimate(
            flops=2 * R * L, transcendentals=0,
            bytes_accessed=2 * R * L * itemsize + R * 2 * 4),
    )(x2d, scale_shift)

    return y2d.reshape(N, C, H, W)


if __name__ == "__main__":
    key = jax.random.PRNGKey(0)
    N, C, H, W = 2, 4, 16, 16
    h1 = C // 2
    h2 = C - h1

    kx, kg1, kb1, kg2, kb2 = jax.random.split(key, 5)
    x = jax.random.normal(kx, (N, C, H, W), dtype=jnp.float32)

    # Non-trivial affine parameters so both affine paths are exercised.
    in_gamma = 1.0 + 0.1 * jax.random.normal(kg1, (h1,), dtype=jnp.float32)
    in_beta = 0.1 * jax.random.normal(kb1, (h1,), dtype=jnp.float32)
    bn_gamma = 1.0 + 0.1 * jax.random.normal(kg2, (h2,), dtype=jnp.float32)
    bn_beta = 0.1 * jax.random.normal(kb2, (h2,), dtype=jnp.float32)

    out = jax.block_until_ready(
        ibn_forward(x, in_gamma, in_beta, bn_gamma, bn_beta))

    # Pure-JAX reference (same semantics as the PyTorch module forward).
    def _ref(x):
        x1, x2 = x[:, :h1], x[:, h1:]
        m1 = x1.mean(axis=(2, 3), keepdims=True)
        v1 = ((x1 - m1) ** 2).mean(axis=(2, 3), keepdims=True)
        y1 = (x1 - m1) / jnp.sqrt(v1 + _EPS)
        y1 = y1 * in_gamma[None, :, None, None] + in_beta[None, :, None, None]
        m2 = x2.mean(axis=(0, 2, 3), keepdims=True)
        v2 = ((x2 - m2) ** 2).mean(axis=(0, 2, 3), keepdims=True)
        y2 = (x2 - m2) / jnp.sqrt(v2 + _EPS)
        y2 = y2 * bn_gamma[None, :, None, None] + bn_beta[None, :, None, None]
        return jnp.concatenate([y1, y2], axis=1)

    ref = _ref(x)
    assert out.shape == (N, C, H, W)
    assert jnp.max(jnp.abs(out - ref)) < 1e-4

    print("KERNEL_OK")
</pallas_src>

<mosaic_0001>
module attributes {stable_mosaic.version = 11 : i64} {
  func.func @_stats_kernel(%arg0: i32, %arg1: memref<8x256xf32, #tpu.memory_space<vmem>>, %arg2: memref<8x2xf32, #tpu.memory_space<vmem>>) attributes {dimension_semantics = [#tpu.dimension_semantics<parallel>], iteration_bounds = array<i64: 1>, scalar_prefetch = 0 : i64, scratch_operands = 0 : i64, tpu.core_type = #tpu.core_type<tc>, window_params = [{transform_indices = @transform_0, window_bounds = array<i64: 8, 256>}, {transform_indices = @transform_1, window_bounds = array<i64: 8, 2>}]} {
    %c0 = arith.constant 0 : index
    %c0_0 = arith.constant 0 : index
    %0 = vector.load %arg1[%c0, %c0_0] : memref<8x256xf32, #tpu.memory_space<vmem>>, vector<8x256xf32>
    %cst = arith.constant dense<0.000000e+00> : vector<8xf32>
    %1 = vector.multi_reduction <add>, %0, %cst [1] : vector<8x256xf32> to vector<8xf32>
    %2 = vector.shape_cast %1 : vector<8xf32> to vector<8x1xf32>
    %3 = arith.mulf %0, %0 : vector<8x256xf32>
    %cst_1 = arith.constant dense<0.000000e+00> : vector<8xf32>
    %4 = vector.multi_reduction <add>, %3, %cst_1 [1] : vector<8x256xf32> to vector<8xf32>
    %5 = vector.shape_cast %4 : vector<8xf32> to vector<8x1xf32>
    %6 = tpu.concatenate %2, %5 in 1 : vector<8x1xf32>, vector<8x1xf32> -> vector<8x2xf32>
    %c0_2 = arith.constant 0 : index
    %c0_3 = arith.constant 0 : index
    %7 = vector.load %arg2[%c0_2, %c0_3] : memref<8x2xf32, #tpu.memory_space<vmem>>, vector<8x2xf32>
    tpu.vector_store %arg2[%c0_2, %c0_3], %6 {strides = array<i32>} : memref<8x2xf32, #tpu.memory_space<vmem>>, vector<8x2xf32>,
    return
  }
  func.func @transform_0(%arg0: i32) -> (i32, i32) {
    %c0_i32 = arith.constant 0 : i32
    %c0_i32_0 = arith.constant 0 : i32
    return %arg0, %c0_i32 : i32, i32
  }
  func.func @transform_1(%arg0: i32) -> (i32, i32) {
    %c0_i32 = arith.constant 0 : i32
    %c0_i32_0 = arith.constant 0 : i32
    return %arg0, %c0_i32 : i32, i32
  }
}

</mosaic_0001>

<llo_original>
// kernel: tpu_custom_call.1
$region0: #{tpu_custom_call.1}
  #allocation0 [shape = 'u32[]', space=smem, size = 0x4, offset = 0x4, fixed_abs, tag = 'smem constant byte address 0x4 - core index']
  #allocation1 [shape = 'u32[72,128]{1,0:T(1,128)}', space=vmem, size = 0x9000, scoped, tag = 'internal scratch']
  %s0 = inlined_call_operand.hbm [shape: f32[8,256], index: 0, kind: input, shape index: {}]
  %s1 = inlined_call_operand.vmem [shape: f32[8,2], index: 1, kind: output, shape index: {}]
  %s2 = sld [smem:[#allocation0]]
  $region18: #{tpu_custom_call.1} parent=0
    _
  %s4 = ssub.s32 1, %s2
  %s5 = scalar_select 0, %s4, %s2
  $region1: #{tpu_custom_call.1} parent=0
    #allocation2 [shape = 'u8[8192]{0}', space=vmem, size = 0x2000, scoped, tag = 'input window, operand 0, single buffered']
    #allocation3 [shape = 's32[1]{0}', space=sflag, size = 0x4, scoped, tag = 'scoped memory for tpu_custom_call.1']
    %6 = vsyncpa [#allocation3], 0
    // Predicated region
    $region2: #{tpu_custom_call.1} parent=1 // pred_check
      _
    $region3: #{tpu_custom_call.1} parent=1 // pred_check_branch
      %8 = sbr.rel (0) target = $region5
    $region4: #{tpu_custom_call.1} parent=1 // pred_region
      %10 = vsyncadd [#allocation3], 0
      %s12 = sshll.u32 %s0, 4
      %s13 = int_to_ptr.hbm [resolvable:$true] %s12
      %s14 = sshll.u32 [#allocation2], 4
      %s15 = int_to_ptr.vmem [resolvable:$true] %s14
      %17 = dma.hbm_to_vmem [thread:$0]  %s13, 256, %s15, [#allocation3]
    $region5: #{tpu_custom_call.1} parent=1 // pred_fallthru
      _
    // Predicated region
    $region6: #{tpu_custom_call.1} parent=1 // pred_check
      _
    $region7: #{tpu_custom_call.1} parent=1 // pred_check_branch
      %19 = sbr.rel (0) target = $region9
    $region8: #{tpu_custom_call.1} parent=1 // pred_region
      %21 = dma.done [#allocation3], 256
    $region9: #{tpu_custom_call.1} parent=1 // pred_fallthru
      _
    %v22 = vld [vmem:[#allocation2] sm:$0xff]
    %v23 = vld [vmem:[#allocation2 + $0x8] sm:$0xff]
    %v24 = vadd.f32 %v22, %v23
    %25 = vadd.xlane.f32.xlu0 %v24
    %v26 = vpop.xlane.xlu0 %25
    %v27 = vmul.f32 %v22, %v22
    %v28 = vmul.f32 %v23, %v23
    %v29 = vadd.f32 %v27, %v28
    %30 = vadd.xlane.f32.xlu0 %v29
    %v31 = vpop.xlane.xlu0 %30
    %vm32 = vcmask 7168
    %v33 = vsel %vm32, %v26, %v31
    %vm34 = vcmask 15360
    %35 = vst.msk [vmem:[%s1] sm:$0xff] %vm34, %v33
    // Predicated region
    $region10: #{tpu_custom_call.1} parent=1 // pred_check
      _
    $region11: #{tpu_custom_call.1} parent=1 // pred_check_branch
      %37 = sbr.rel (0) target = $region13
    $region12: #{tpu_custom_call.1} parent=1 // pred_region
      _
    $region13: #{tpu_custom_call.1} parent=1 // pred_fallthru
      _
    // Predicated region
    $region14: #{tpu_custom_call.1} parent=1 // pred_check
      _
    $region15: #{tpu_custom_call.1} parent=1 // pred_check_branch
      %39 = sbr.rel (0) target = $region17
    $region16: #{tpu_custom_call.1} parent=1 // pred_region
      _
    $region17: #{tpu_custom_call.1} parent=1 // pred_fallthru
      _
    %40 = vsyncpa [#allocation3], 1

</llo_original>
